<compile_context>
chip_gen: v6e
topology: v6e:2x2x1
jax: 0.10.0
libtpu: 0.0.40
codegen_flags: <defaults>
</compile_context>

<pallas_src>
import jax
import jax.numpy as jnp
from jax.experimental import pallas as pl
from jax.experimental.pallas import tpu as pltpu

SUBLANES = 8          # f32 vreg sublane count
MAX_LANE_TILE = 32768  # lanes per grid step: 1 MiB in + 4 MiB out per step

# Packed parameter layout (22 f32 scalars, resident in SMEM):
#   [0:3]   W1 (in=1, out=3)           w1[0, j]   -> idx j
#   [3:6]   b1 (3,)                    b1[j]      -> idx 3 + j
#   [6:18]  W2 (in=3, out=4) row-major w2[r, c]   -> idx 6 + 4*r + c
#   [18:22] b2 (4,)                    b2[c]      -> idx 18 + c


def _sigmoid(z):
    # exp and vrcp both live in the EUP slot; the Newton refinement is cheap
    # VALU filler that restores ~f32 accuracy of the approximate reciprocal.
    e = jnp.exp(-z)
    d = 1.0 + e
    r = pl.reciprocal(d, approx=True)
    return r * (2.0 - d * r)


def generator_kernel(p_ref, x_ref, o_ref):
    # x_ref: (8, LT)     f32, batch packed densely over sublanes x lanes
    # o_ref: (4, 8, LT)  f32, feature-major; each feature is a dense plane
    x = x_ref[...]
    # Layer 1 (Linear(1,3)) + Sigmoid: K=1, so it is just x * w1_j + b1_j
    # as scalar-broadcast VPU fmas; exp/recip run on the EUP slot.
    h = [_sigmoid(x * p_ref[j] + p_ref[3 + j]) for j in range(3)]
    # Layer 2 (Linear(3,4)) + Sigmoid: 3-term unrolled fma per output feature,
    # stored directly per feature plane (no cross-sublane concatenate).
    for k in range(4):
        y = (h[0] * p_ref[6 + k]
             + h[1] * p_ref[10 + k]
             + h[2] * p_ref[14 + k]
             + p_ref[18 + k])
        o_ref[k, :, :] = _sigmoid(y)


def generator_forward_packed(x_flat, packed_params):
    """x_flat: (B,) f32 noise. Returns (4, 8, cols_p) f32 feature-major output
    where batch element b lives at [:, b // cols_p, b % cols_p].
    This is the layout a fused downstream (discriminator) kernel should consume
    directly — no transpose / relayout on the memory-bound output."""
    B = x_flat.shape[0]
    cols = -(-B // SUBLANES)                       # ceil(B / 8)
    if cols >= MAX_LANE_TILE:
        lane_tile = MAX_LANE_TILE
    else:
        lane_tile = -(-cols // 128) * 128          # round up to lane multiple
    n_tiles = -(-cols // lane_tile)
    cols_p = n_tiles * lane_tile
    Bp = SUBLANES * cols_p

    # Zero-pad and lay the batch out densely over (sublane, lane).
    xt = jnp.zeros((Bp,), jnp.float32).at[:B].set(x_flat)
    xt = xt.reshape(SUBLANES, cols_p)

    out = pl.pallas_call(
        generator_kernel,
        out_shape=jax.ShapeDtypeStruct((4, SUBLANES, cols_p), jnp.float32),
        grid=(n_tiles,),
        in_specs=[
            # All params in one tiny SMEM buffer (no VMEM tiles, no per-param DMA).
            pl.BlockSpec(memory_space=pltpu.MemorySpace.SMEM),
            # Dense batch tile: full sublanes, lane-dense.
            pl.BlockSpec((SUBLANES, lane_tile), lambda i: (0, i)),
        ],
        out_specs=pl.BlockSpec((4, SUBLANES, lane_tile), lambda i: (0, 0, i)),
        compiler_params=pltpu.CompilerParams(
            dimension_semantics=("parallel",),      # shards tiles across TCs
            vmem_limit_bytes=32 * 1024 * 1024,      # ~10 MiB needed; safe on v5e/v6e/v7x
        ),
    )(packed_params, xt)
    return out


def generator_forward(x, packed_params):
    """PyTorch-compatible wrapper: x (B, 1) f32 -> (B, 4) f32.
    The final reshape/transpose exists only to reproduce the nn.Module layout
    for verification; fused pipelines should use generator_forward_packed."""
    B = x.shape[0]
    out = generator_forward_packed(x[:, 0], packed_params)   # (4, 8, cols_p)
    return out.reshape(4, -1).T[:B]                           # (B, 4)


def init_params(key):
    # Deterministic init mimicking PyTorch nn.Linear default:
    # U(-1/sqrt(fan_in), 1/sqrt(fan_in)); weights stored as [in, out].
    k1, k2, k3, k4 = jax.random.split(key, 4)
    bnd1 = 1.0 / jnp.sqrt(1.0)   # fan_in = 1
    bnd2 = 1.0 / jnp.sqrt(3.0)   # fan_in = 3
    w1 = jax.random.uniform(k1, (1, 3), jnp.float32, -bnd1, bnd1)
    b1 = jax.random.uniform(k2, (3,), jnp.float32, -bnd1, bnd1)
    w2 = jax.random.uniform(k3, (3, 4), jnp.float32, -bnd2, bnd2)
    b2 = jax.random.uniform(k4, (4,), jnp.float32, -bnd2, bnd2)
    packed = jnp.concatenate([w1.ravel(), b1.ravel(), w2.ravel(), b2.ravel()])
    return (w1, b1, w2, b2), packed


if __name__ == "__main__":
    key = jax.random.PRNGKey(0)
    k_in, k_par = jax.random.split(key)

    B = 2
    # Generator input in the study script is a single random scalar per sample.
    x = jax.random.uniform(k_in, (B, 1), jnp.float32)
    (w1, b1, w2, b2), packed = init_params(k_par)

    out = jax.block_until_ready(generator_forward(x, packed))

    # Pure-JAX reference check (same math in the PyTorch layout).
    ref = jax.nn.sigmoid(jax.nn.sigmoid(x @ w1 + b1) @ w2 + b2)
    assert out.shape == (B, 4)
    assert jnp.allclose(out, ref, atol=1e-4), (out, ref)

    # TODO(synk): training machinery (Adam optimiser, MSELoss, train loop,
    # plot_progress) is host-side PyTorch logic, not part of the forward kernel.
    print("KERNEL_OK")
</pallas_src>

<mosaic_0001>
module attributes {stable_mosaic.version = 11 : i64} {
  func.func @generator_kernel(%arg0: i32, %arg1: memref<22xf32, #tpu.memory_space<smem>>, %arg2: memref<8x128xf32, #tpu.memory_space<vmem>>, %arg3: memref<4x8x128xf32, #tpu.memory_space<vmem>>) attributes {dimension_semantics = [#tpu.dimension_semantics<parallel>], iteration_bounds = array<i64: 1>, scalar_prefetch = 0 : i64, scratch_operands = 0 : i64, tpu.core_type = #tpu.core_type<tc>, window_params = [{transform_indices = @transform_0, window_bounds = array<i64: 22>}, {transform_indices = @transform_1, window_bounds = array<i64: 8, 128>}, {transform_indices = @transform_2, window_bounds = array<i64: 4, 8, 128>}]} {
    %c0 = arith.constant 0 : index
    %c0_0 = arith.constant 0 : index
    %0 = vector.load %arg2[%c0, %c0_0] : memref<8x128xf32, #tpu.memory_space<vmem>>, vector<8x128xf32>
    %c0_1 = arith.constant 0 : index
    %1 = memref.load %arg1[%c0_1] : memref<22xf32, #tpu.memory_space<smem>>
    %2 = vector.broadcast %1 : f32 to vector<8x128xf32>
    %3 = arith.mulf %0, %2 : vector<8x128xf32>
    %c3 = arith.constant 3 : index
    %4 = memref.load %arg1[%c3] : memref<22xf32, #tpu.memory_space<smem>>
    %5 = vector.broadcast %4 : f32 to vector<8x128xf32>
    %6 = arith.addf %3, %5 : vector<8x128xf32>
    %cst = arith.constant 0.000000e+00 : f32
    %7 = vector.broadcast %cst : f32 to vector<8x128xf32>
    %8 = arith.subf %7, %6 : vector<8x128xf32>
    %9 = math.exp %8 : vector<8x128xf32>
    %cst_2 = arith.constant 1.000000e+00 : f32
    %10 = vector.broadcast %cst_2 : f32 to vector<8x128xf32>
    %11 = arith.addf %10, %9 : vector<8x128xf32>
    %12 = tpu.reciprocal %11 {approx = true} : vector<8x128xf32> -> vector<8x128xf32>
    %13 = arith.mulf %11, %12 : vector<8x128xf32>
    %cst_3 = arith.constant 2.000000e+00 : f32
    %14 = vector.broadcast %cst_3 : f32 to vector<8x128xf32>
    %15 = arith.subf %14, %13 : vector<8x128xf32>
    %16 = arith.mulf %12, %15 : vector<8x128xf32>
    %c1 = arith.constant 1 : index
    %17 = memref.load %arg1[%c1] : memref<22xf32, #tpu.memory_space<smem>>
    %18 = vector.broadcast %17 : f32 to vector<8x128xf32>
    %19 = arith.mulf %0, %18 : vector<8x128xf32>
    %c4 = arith.constant 4 : index
    %20 = memref.load %arg1[%c4] : memref<22xf32, #tpu.memory_space<smem>>
    %21 = vector.broadcast %20 : f32 to vector<8x128xf32>
    %22 = arith.addf %19, %21 : vector<8x128xf32>
    %cst_4 = arith.constant 0.000000e+00 : f32
    %23 = vector.broadcast %cst_4 : f32 to vector<8x128xf32>
    %24 = arith.subf %23, %22 : vector<8x128xf32>
    %25 = math.exp %24 : vector<8x128xf32>
    %cst_5 = arith.constant 1.000000e+00 : f32
    %26 = vector.broadcast %cst_5 : f32 to vector<8x128xf32>
    %27 = arith.addf %26, %25 : vector<8x128xf32>
    %28 = tpu.reciprocal %27 {approx = true} : vector<8x128xf32> -> vector<8x128xf32>
    %29 = arith.mulf %27, %28 : vector<8x128xf32>
    %cst_6 = arith.constant 2.000000e+00 : f32
    %30 = vector.broadcast %cst_6 : f32 to vector<8x128xf32>
    %31 = arith.subf %30, %29 : vector<8x128xf32>
    %32 = arith.mulf %28, %31 : vector<8x128xf32>
    %c2 = arith.constant 2 : index
    %33 = memref.load %arg1[%c2] : memref<22xf32, #tpu.memory_space<smem>>
    %34 = vector.broadcast %33 : f32 to vector<8x128xf32>
    %35 = arith.mulf %0, %34 : vector<8x128xf32>
    %c5 = arith.constant 5 : index
    %36 = memref.load %arg1[%c5] : memref<22xf32, #tpu.memory_space<smem>>
    %37 = vector.broadcast %36 : f32 to vector<8x128xf32>
    %38 = arith.addf %35, %37 : vector<8x128xf32>
    %cst_7 = arith.constant 0.000000e+00 : f32
    %39 = vector.broadcast %cst_7 : f32 to vector<8x128xf32>
    %40 = arith.subf %39, %38 : vector<8x128xf32>
    %41 = math.exp %40 : vector<8x128xf32>
    %cst_8 = arith.constant 1.000000e+00 : f32
    %42 = vector.broadcast %cst_8 : f32 to vector<8x128xf32>
    %43 = arith.addf %42, %41 : vector<8x128xf32>
    %44 = tpu.reciprocal %43 {approx = true} : vector<8x128xf32> -> vector<8x128xf32>
    %45 = arith.mulf %43, %44 : vector<8x128xf32>
    %cst_9 = arith.constant 2.000000e+00 : f32
    %46 = vector.broadcast %cst_9 : f32 to vector<8x128xf32>
    %47 = arith.subf %46, %45 : vector<8x128xf32>
    %48 = arith.mulf %44, %47 : vector<8x128xf32>
    %c6 = arith.constant 6 : index
    %49 = memref.load %arg1[%c6] : memref<22xf32, #tpu.memory_space<smem>>
    %50 = vector.broadcast %49 : f32 to vector<8x128xf32>
    %51 = arith.mulf %16, %50 : vector<8x128xf32>
    %c10 = arith.constant 10 : index
    %52 = memref.load %arg1[%c10] : memref<22xf32, #tpu.memory_space<smem>>
    %53 = vector.broadcast %52 : f32 to vector<8x128xf32>
    %54 = arith.mulf %32, %53 : vector<8x128xf32>
    %55 = arith.addf %51, %54 : vector<8x128xf32>
    %c14 = arith.constant 14 : index
    %56 = memref.load %arg1[%c14] : memref<22xf32, #tpu.memory_space<smem>>
    %57 = vector.broadcast %56 : f32 to vector<8x128xf32>
    %58 = arith.mulf %48, %57 : vector<8x128xf32>
    %59 = arith.addf %55, %58 : vector<8x128xf32>
    %c18 = arith.constant 18 : index
    %60 = memref.load %arg1[%c18] : memref<22xf32, #tpu.memory_space<smem>>
    %61 = vector.broadcast %60 : f32 to vector<8x128xf32>
    %62 = arith.addf %59, %61 : vector<8x128xf32>
    %cst_10 = arith.constant 0.000000e+00 : f32
    %63 = vector.broadcast %cst_10 : f32 to vector<8x128xf32>
    %64 = arith.subf %63, %62 : vector<8x128xf32>
    %65 = math.exp %64 : vector<8x128xf32>
    %cst_11 = arith.constant 1.000000e+00 : f32
    %66 = vector.broadcast %cst_11 : f32 to vector<8x128xf32>
    %67 = arith.addf %66, %65 : vector<8x128xf32>
    %68 = tpu.reciprocal %67 {approx = true} : vector<8x128xf32> -> vector<8x128xf32>
    %69 = arith.mulf %67, %68 : vector<8x128xf32>
    %cst_12 = arith.constant 2.000000e+00 : f32
    %70 = vector.broadcast %cst_12 : f32 to vector<8x128xf32>
    %71 = arith.subf %70, %69 : vector<8x128xf32>
    %72 = arith.mulf %68, %71 : vector<8x128xf32>
    %c0_13 = arith.constant 0 : index
    %c0_14 = arith.constant 0 : index
    %c0_15 = arith.constant 0 : index
    %73 = vector.load %arg3[%c0_13, %c0_14, %c0_15] : memref<4x8x128xf32, #tpu.memory_space<vmem>>, vector<1x8x128xf32>
    %74 = vector.shape_cast %73 : vector<1x8x128xf32> to vector<8x128xf32>
    %75 = vector.shape_cast %72 : vector<8x128xf32> to vector<1x8x128xf32>
    tpu.vector_store %arg3[%c0_13, %c0_14, %c0_15], %75 {strides = array<i32>} : memref<4x8x128xf32, #tpu.memory_space<vmem>>, vector<1x8x128xf32>,
    %c7 = arith.constant 7 : index
    %76 = memref.load %arg1[%c7] : memref<22xf32, #tpu.memory_space<smem>>
    %77 = vector.broadcast %76 : f32 to vector<8x128xf32>
    %78 = arith.mulf %16, %77 : vector<8x128xf32>
    %c11 = arith.constant 11 : index
    %79 = memref.load %arg1[%c11] : memref<22xf32, #tpu.memory_space<smem>>
    %80 = vector.broadcast %79 : f32 to vector<8x128xf32>
    %81 = arith.mulf %32, %80 : vector<8x128xf32>
    %82 = arith.addf %78, %81 : vector<8x128xf32>
    %c15 = arith.constant 15 : index
    %83 = memref.load %arg1[%c15] : memref<22xf32, #tpu.memory_space<smem>>
    %84 = vector.broadcast %83 : f32 to vector<8x128xf32>
    %85 = arith.mulf %48, %84 : vector<8x128xf32>
    %86 = arith.addf %82, %85 : vector<8x128xf32>
    %c19 = arith.constant 19 : index
    %87 = memref.load %arg1[%c19] : memref<22xf32, #tpu.memory_space<smem>>
    %88 = vector.broadcast %87 : f32 to vector<8x128xf32>
    %89 = arith.addf %86, %88 : vector<8x128xf32>
    %cst_16 = arith.constant 0.000000e+00 : f32
    %90 = vector.broadcast %cst_16 : f32 to vector<8x128xf32>
    %91 = arith.subf %90, %89 : vector<8x128xf32>
    %92 = math.exp %91 : vector<8x128xf32>
    %cst_17 = arith.constant 1.000000e+00 : f32
    %93 = vector.broadcast %cst_17 : f32 to vector<8x128xf32>
    %94 = arith.addf %93, %92 : vector<8x128xf32>
    %95 = tpu.reciprocal %94 {approx = true} : vector<8x128xf32> -> vector<8x128xf32>
    %96 = arith.mulf %94, %95 : vector<8x128xf32>
    %cst_18 = arith.constant 2.000000e+00 : f32
    %97 = vector.broadcast %cst_18 : f32 to vector<8x128xf32>
    %98 = arith.subf %97, %96 : vector<8x128xf32>
    %99 = arith.mulf %95, %98 : vector<8x128xf32>
    %c1_19 = arith.constant 1 : index
    %c0_20 = arith.constant 0 : index
    %c0_21 = arith.constant 0 : index
    %100 = vector.load %arg3[%c1_19, %c0_20, %c0_21] : memref<4x8x128xf32, #tpu.memory_space<vmem>>, vector<1x8x128xf32>
    %101 = vector.shape_cast %100 : vector<1x8x128xf32> to vector<8x128xf32>
    %102 = vector.shape_cast %99 : vector<8x128xf32> to vector<1x8x128xf32>
    tpu.vector_store %arg3[%c1_19, %c0_20, %c0_21], %102 {strides = array<i32>} : memref<4x8x128xf32, #tpu.memory_space<vmem>>, vector<1x8x128xf32>,
    %c8 = arith.constant 8 : index
    %103 = memref.load %arg1[%c8] : memref<22xf32, #tpu.memory_space<smem>>
    %104 = vector.broadcast %103 : f32 to vector<8x128xf32>
    %105 = arith.mulf %16, %104 : vector<8x128xf32>
    %c12 = arith.constant 12 : index
    %106 = memref.load %arg1[%c12] : memref<22xf32, #tpu.memory_space<smem>>
    %107 = vector.broadcast %106 : f32 to vector<8x128xf32>
    %108 = arith.mulf %32, %107 : vector<8x128xf32>
    %109 = arith.addf %105, %108 : vector<8x128xf32>
    %c16 = arith.constant 16 : index
    %110 = memref.load %arg1[%c16] : memref<22xf32, #tpu.memory_space<smem>>
    %111 = vector.broadcast %110 : f32 to vector<8x128xf32>
    %112 = arith.mulf %48, %111 : vector<8x128xf32>
    %113 = arith.addf %109, %112 : vector<8x128xf32>
    %c20 = arith.constant 20 : index
    %114 = memref.load %arg1[%c20] : memref<22xf32, #tpu.memory_space<smem>>
    %115 = vector.broadcast %114 : f32 to vector<8x128xf32>
    %116 = arith.addf %113, %115 : vector<8x128xf32>
    %cst_22 = arith.constant 0.000000e+00 : f32
    %117 = vector.broadcast %cst_22 : f32 to vector<8x128xf32>
    %118 = arith.subf %117, %116 : vector<8x128xf32>
    %119 = math.exp %118 : vector<8x128xf32>
    %cst_23 = arith.constant 1.000000e+00 : f32
    %120 = vector.broadcast %cst_23 : f32 to vector<8x128xf32>
    %121 = arith.addf %120, %119 : vector<8x128xf32>
    %122 = tpu.reciprocal %121 {approx = true} : vector<8x128xf32> -> vector<8x128xf32>
    %123 = arith.mulf %121, %122 : vector<8x128xf32>
    %cst_24 = arith.constant 2.000000e+00 : f32
    %124 = vector.broadcast %cst_24 : f32 to vector<8x128xf32>
    %125 = arith.subf %124, %123 : vector<8x128xf32>
    %126 = arith.mulf %122, %125 : vector<8x128xf32>
    %c2_25 = arith.constant 2 : index
    %c0_26 = arith.constant 0 : index
    %c0_27 = arith.constant 0 : index
    %127 = vector.load %arg3[%c2_25, %c0_26, %c0_27] : memref<4x8x128xf32, #tpu.memory_space<vmem>>, vector<1x8x128xf32>
    %128 = vector.shape_cast %127 : vector<1x8x128xf32> to vector<8x128xf32>
    %129 = vector.shape_cast %126 : vector<8x128xf32> to vector<1x8x128xf32>
    tpu.vector_store %arg3[%c2_25, %c0_26, %c0_27], %129 {strides = array<i32>} : memref<4x8x128xf32, #tpu.memory_space<vmem>>, vector<1x8x128xf32>,
    %c9 = arith.constant 9 : index
    %130 = memref.load %arg1[%c9] : memref<22xf32, #tpu.memory_space<smem>>
    %131 = vector.broadcast %130 : f32 to vector<8x128xf32>
    %132 = arith.mulf %16, %131 : vector<8x128xf32>
    %c13 = arith.constant 13 : index
    %133 = memref.load %arg1[%c13] : memref<22xf32, #tpu.memory_space<smem>>
    %134 = vector.broadcast %133 : f32 to vector<8x128xf32>
    %135 = arith.mulf %32, %134 : vector<8x128xf32>
    %136 = arith.addf %132, %135 : vector<8x128xf32>
    %c17 = arith.constant 17 : index
    %137 = memref.load %arg1[%c17] : memref<22xf32, #tpu.memory_space<smem>>
    %138 = vector.broadcast %137 : f32 to vector<8x128xf32>
    %139 = arith.mulf %48, %138 : vector<8x128xf32>
    %140 = arith.addf %136, %139 : vector<8x128xf32>
    %c21 = arith.constant 21 : index
    %141 = memref.load %arg1[%c21] : memref<22xf32, #tpu.memory_space<smem>>
    %142 = vector.broadcast %141 : f32 to vector<8x128xf32>
    %143 = arith.addf %140, %142 : vector<8x128xf32>
    %cst_28 = arith.constant 0.000000e+00 : f32
    %144 = vector.broadcast %cst_28 : f32 to vector<8x128xf32>
    %145 = arith.subf %144, %143 : vector<8x128xf32>
    %146 = math.exp %145 : vector<8x128xf32>
    %cst_29 = arith.constant 1.000000e+00 : f32
    %147 = vector.broadcast %cst_29 : f32 to vector<8x128xf32>
    %148 = arith.addf %147, %146 : vector<8x128xf32>
    %149 = tpu.reciprocal %148 {approx = true} : vector<8x128xf32> -> vector<8x128xf32>
    %150 = arith.mulf %148, %149 : vector<8x128xf32>
    %cst_30 = arith.constant 2.000000e+00 : f32
    %151 = vector.broadcast %cst_30 : f32 to vector<8x128xf32>
    %152 = arith.subf %151, %150 : vector<8x128xf32>
    %153 = arith.mulf %149, %152 : vector<8x128xf32>
    %c3_31 = arith.constant 3 : index
    %c0_32 = arith.constant 0 : index
    %c0_33 = arith.constant 0 : index
    %154 = vector.load %arg3[%c3_31, %c0_32, %c0_33] : memref<4x8x128xf32, #tpu.memory_space<vmem>>, vector<1x8x128xf32>
    %155 = vector.shape_cast %154 : vector<1x8x128xf32> to vector<8x128xf32>
    %156 = vector.shape_cast %153 : vector<8x128xf32> to vector<1x8x128xf32>
    tpu.vector_store %arg3[%c3_31, %c0_32, %c0_33], %156 {strides = array<i32>} : memref<4x8x128xf32, #tpu.memory_space<vmem>>, vector<1x8x128xf32>,
    return
  }
  func.func @transform_0(%arg0: i32) -> i32 {
    %c0_i32 = arith.constant 0 : i32
    %c0_i32_0 = arith.constant 0 : i32
    return %c0_i32 : i32
  }
  func.func @transform_1(%arg0: i32) -> (i32, i32) {
    %c0_i32 = arith.constant 0 : i32
    %c0_i32_0 = arith.constant 0 : i32
    return %c0_i32, %arg0 : i32, i32
  }
  func.func @transform_2(%arg0: i32) -> (i32, i32, i32) {
    %c0_i32 = arith.constant 0 : i32
    %c0_i32_0 = arith.constant 0 : i32
    %c0_i32_1 = arith.constant 0 : i32
    return %c0_i32, %c0_i32_0, %arg0 : i32, i32, i32
  }
}

</mosaic_0001>

<llo_original>
// kernel: tpu_custom_call.1
$region0: #{tpu_custom_call.1}
  #allocation0 [shape = 'u32[]', space=smem, size = 0x4, offset = 0x4, fixed_abs, tag = 'smem constant byte address 0x4 - core index']
  #allocation1 [shape = 'u32[144,128]{1,0:T(1,128)}', space=vmem, size = 0x12000, scoped, tag = 'internal scratch']
  %s0 = inlined_call_operand.hbm [shape: f32[22], index: 0, kind: input, shape index: {}]
  %s1 = inlined_call_operand.hbm [shape: f32[8,128], index: 1, kind: input, shape index: {}]
  %s2 = inlined_call_operand.hbm [shape: f32[4,8,128], index: 2, kind: output, shape index: {}]
  %s3 = sld [smem:[#allocation0]]
  $region26: #{tpu_custom_call.1} parent=0
    _
  %s5 = ssub.s32 1, %s3
  %s6 = scalar_select 0, %s5, %s3
  $region1: #{tpu_custom_call.1} parent=0
    #allocation2 [shape = 'u8[512]{0}', space=smem, size = 0x200, scoped, tag = 'input window, operand 0, single buffered']
    #allocation3 [shape = 's32[1]{0}', space=sflag, size = 0x4, scoped, tag = 'scoped memory for tpu_custom_call.1']
    #allocation4 [shape = 's32[1]{0}', space=sflag, size = 0x4, scoped, tag = 'scoped memory for tpu_custom_call.1']
    #allocation5 [shape = 's32[1]{0}', space=sflag, size = 0x4, scoped, tag = 'scoped memory for tpu_custom_call.1']
    #allocation6 [shape = 'u8[4096]{0}', space=vmem, size = 0x1000, scoped, tag = 'input window, operand 1, single buffered']
    #allocation7 [shape = 'u8[16384]{0}', space=vmem, size = 0x4000, scoped, tag = 'output window, operand 0, single buffered']
    %7 = vsyncpa [#allocation5], 0
    %8 = vsyncpa [#allocation3], 0
    %9 = vsyncpa [#allocation4], 0
    // Predicated region
    $region2: #{tpu_custom_call.1} parent=1 // pred_check
      _
    $region3: #{tpu_custom_call.1} parent=1 // pred_check_branch
      %11 = sbr.rel (0) target = $region5
    $region4: #{tpu_custom_call.1} parent=1 // pred_region
      %s13 = ssub.s32 16, 16
      %14 = vsyncadd [#allocation5], %s13
      %17 = dma.hbm_to_smem %s0, 16, [#allocation2], [#allocation5]
    $region5: #{tpu_custom_call.1} parent=1 // pred_fallthru
      _
    // Predicated region
    $region6: #{tpu_custom_call.1} parent=1 // pred_check
      _
    $region7: #{tpu_custom_call.1} parent=1 // pred_check_branch
      %19 = sbr.rel (0) target = $region9
    $region8: #{tpu_custom_call.1} parent=1 // pred_region
      %s21 = ssub.s32 128, 128
      %22 = vsyncadd [#allocation3], %s21
      %s24 = sshll.u32 [#allocation6], 4
      %s25 = int_to_ptr.vmem [resolvable:$true] %s24
      %27 = dma.hbm_to_vmem [thread:$0]  %s1, 128, %s25, [#allocation3]
    $region9: #{tpu_custom_call.1} parent=1 // pred_fallthru
      _
    // Predicated region
    $region10: #{tpu_custom_call.1} parent=1 // pred_check
      _
    $region11: #{tpu_custom_call.1} parent=1 // pred_check_branch
      %29 = sbr.rel (0) target = $region13
    $region12: #{tpu_custom_call.1} parent=1 // pred_region
      %30 = dma.done [#allocation5], 16
    $region13: #{tpu_custom_call.1} parent=1 // pred_fallthru
      _
    // Predicated region
    $region14: #{tpu_custom_call.1} parent=1 // pred_check
      _
    $region15: #{tpu_custom_call.1} parent=1 // pred_check_branch
      %32 = sbr.rel (0) target = $region17
    $region16: #{tpu_custom_call.1} parent=1 // pred_region
      %33 = dma.done [#allocation3], 128
    $region17: #{tpu_custom_call.1} parent=1 // pred_fallthru
      _
    %34 = sfence
    %v35 = vld [vmem:[#allocation6] sm:$0xff]
    %s36 = sld [smem:[#allocation2]]
    %v37 = vstv %s36
    %v38 = vmul.f32 %v35, %v37
    %s39 = sld [smem:[#allocation2 + $0x3]]
    %v40 = vstv %s39
    %v41 = vadd.f32 %v38, %v40
    %v42 = vsub.f32 0.0, %v41
    %v43 = vmul.f32 %v42, 1.442695
    %v44 = vpow.pop %v43
    %v45 = vadd.f32 %v44, 1.0
    %v46 = vrcp.pop %v45
    %v47 = vmul.f32 %v45, %v46
    %v48 = vsub.f32 2.0, %v47
    %v49 = vmul.f32 %v46, %v48
    %s50 = sld [smem:[#allocation2 + $0x1]]
    %v51 = vstv %s50
    %v52 = vmul.f32 %v35, %v51
    %s53 = sld [smem:[#allocation2 + $0x4]]
    %v54 = vstv %s53
    %v55 = vadd.f32 %v52, %v54
    %v56 = vsub.f32 0.0, %v55
    %v57 = vmul.f32 %v56, 1.442695
    %v58 = vpow.pop %v57
    %v59 = vadd.f32 %v58, 1.0
    %v60 = vrcp.pop %v59
    %v61 = vmul.f32 %v59, %v60
    %v62 = vsub.f32 2.0, %v61
    %v63 = vmul.f32 %v60, %v62
    %s64 = sld [smem:[#allocation2 + $0x2]]
    %v65 = vstv %s64
    %v66 = vmul.f32 %v35, %v65
    %s67 = sld [smem:[#allocation2 + $0x5]]
    %v68 = vstv %s67
    %v69 = vadd.f32 %v66, %v68
    %v70 = vsub.f32 0.0, %v69
    %v71 = vmul.f32 %v70, 1.442695
    %v72 = vpow.pop %v71
    %v73 = vadd.f32 %v72, 1.0
    %v74 = vrcp.pop %v73
    %v75 = vmul.f32 %v73, %v74
    %v76 = vsub.f32 2.0, %v75
    %v77 = vmul.f32 %v74, %v76
    %s78 = sld [smem:[#allocation2 + $0x6]]
    %v79 = vstv %s78
    %v80 = vmul.f32 %v49, %v79
    %s81 = sld [smem:[#allocation2 + $0xa]]
    %v82 = vstv %s81
    %v83 = vmul.f32 %v63, %v82
    %v84 = vadd.f32 %v80, %v83
    %s85 = sld [smem:[#allocation2 + $0xe]]
    %v86 = vstv %s85
    %v87 = vmul.f32 %v77, %v86
    %v88 = vadd.f32 %v84, %v87
    %s89 = sld [smem:[#allocation2 + $0x12]]
    %v90 = vstv %s89
    %v91 = vadd.f32 %v88, %v90
    %v92 = vsub.f32 0.0, %v91
    %v93 = vmul.f32 %v92, 1.442695
    %v94 = vpow.pop %v93
    %v95 = vadd.f32 %v94, 1.0
    %v96 = vrcp.pop %v95
    %v97 = vmul.f32 %v95, %v96
    %v98 = vsub.f32 2.0, %v97
    %v99 = vmul.f32 %v96, %v98
    %100 = vst [vmem:[#allocation7] sm:$0xff] %v99
    %s101 = sld [smem:[#allocation2 + $0x7]]
    %v102 = vstv %s101
    %v103 = vmul.f32 %v49, %v102
    %s104 = sld [smem:[#allocation2 + $0xb]]
    %v105 = vstv %s104
    %v106 = vmul.f32 %v63, %v105
    %v107 = vadd.f32 %v103, %v106
    %s108 = sld [smem:[#allocation2 + $0xf]]
    %v109 = vstv %s108
    %v110 = vmul.f32 %v77, %v109
    %v111 = vadd.f32 %v107, %v110
    %s112 = sld [smem:[#allocation2 + $0x13]]
    %v113 = vstv %s112
    %v114 = vadd.f32 %v111, %v113
    %v115 = vsub.f32 0.0, %v114
    %v116 = vmul.f32 %v115, 1.442695
    %v117 = vpow.pop %v116
    %v118 = vadd.f32 %v117, 1.0
    %v119 = vrcp.pop %v118
    %v120 = vmul.f32 %v118, %v119
    %v121 = vsub.f32 2.0, %v120
    %v122 = vmul.f32 %v119, %v121
    %s123 = scalar_lea.vmem [#allocation7], 8
    %124 = vst [vmem:[%s123] sm:$0xff] %v122
    %s125 = sld [smem:[#allocation2 + $0x8]]
    %v126 = vstv %s125
    %v127 = vmul.f32 %v49, %v126
    %s128 = sld [smem:[#allocation2 + $0xc]]
    %v129 = vstv %s128
    %v130 = vmul.f32 %v63, %v129
    %v131 = vadd.f32 %v127, %v130
    %s132 = sld [smem:[#allocation2 + $0x10]]
    %v133 = vstv %s132
    %v134 = vmul.f32 %v77, %v133
    %v135 = vadd.f32 %v131, %v134
    %s136 = sld [smem:[#allocation2 + $0x14]]
    %v137 = vstv %s136
    %v138 = vadd.f32 %v135, %v137
    %v139 = vsub.f32 0.0, %v138
    %v140 = vmul.f32 %v139, 1.442695
    %v141 = vpow.pop %v140
    %v142 = vadd.f32 %v141, 1.0
    %v143 = vrcp.pop %v142
    %v144 = vmul.f32 %v142, %v143
    %v145 = vsub.f32 2.0, %v144
    %v146 = vmul.f32 %v143, %v145
    %s147 = scalar_lea.vmem [#allocation7], 16
    %148 = vst [vmem:[%s147] sm:$0xff] %v146
    %s149 = sld [smem:[#allocation2 + $0x9]]
    %v150 = vstv %s149
    %v151 = vmul.f32 %v49, %v150
    %s152 = sld [smem:[#allocation2 + $0xd]]
    %v153 = vstv %s152
    %v154 = vmul.f32 %v63, %v153
    %v155 = vadd.f32 %v151, %v154
    %s156 = sld [smem:[#allocation2 + $0x11]]
    %v157 = vstv %s156
    %v158 = vmul.f32 %v77, %v157
    %v159 = vadd.f32 %v155, %v158
    %s160 = sld [smem:[#allocation2 + $0x15]]
    %v161 = vstv %s160
    %v162 = vadd.f32 %v159, %v161
    %v163 = vsub.f32 0.0, %v162
    %v164 = vmul.f32 %v163, 1.442695
    %v165 = vpow.pop %v164
    %v166 = vadd.f32 %v165, 1.0
    %v167 = vrcp.pop %v166
    %v168 = vmul.f32 %v166, %v167
    %v169 = vsub.f32 2.0, %v168
    %v170 = vmul.f32 %v167, %v169
    %s171 = scalar_lea.vmem [#allocation7], 24
    %172 = vst [vmem:[%s171] sm:$0xff] %v170
    // Predicated region
    $region18: #{tpu_custom_call.1} parent=1 // pred_check
      _
    $region19: #{tpu_custom_call.1} parent=1 // pred_check_branch
      %174 = sbr.rel (0) target = $region21
    $region20: #{tpu_custom_call.1} parent=1 // pred_region
      %s176 = ssub.s32 512, 512
      %177 = vsyncadd [#allocation4], %s176
      %s178 = sshll.u32 [#allocation7], 4
      %s179 = int_to_ptr.vmem [resolvable:$true] %s178
      %184 = dma.vmem_to_hbm [thread:$0]  %s179, 512, %s2, [#allocation4], 128, 128, 8
    $region21: #{tpu_custom_call.1} parent=1 // pred_fallthru
      _
    // Predicated region
    $region22: #{tpu_custom_call.1} parent=1 // pred_check
      _
    $region23: #{tpu_custom_call.1} parent=1 // pred_check_branch
      %186 = sbr.rel (0) target = $region25
    $region24: #{tpu_custom_call.1} parent=1 // pred_region
      %187 = dma.done [#allocation4], 512
    $region25: #{tpu_custom_call.1} parent=1 // pred_fallthru
      _
    %188 = vsyncpa [#allocation3], 1
    %189 = vsyncpa [#allocation4], 1
    %190 = vsyncpa [#allocation5], 1

</llo_original>
